<compile_context>
chip_gen: v7x
topology: tpu7x:2x2x1
jax: 0.10.0
libtpu: 0.0.40
codegen_flags: <defaults>
</compile_context>

<pallas_src>
import functools

import jax
import jax.numpy as jnp
from jax.experimental import pallas as pl
from jax.experimental.pallas import tpu as pltpu


def _round_up(x, m):
    return (x + m - 1) // m * m


def _choose_tile(dim, quantum, max_tile):
    """Return (tile, padded_dim): tile multiple of `quantum`,
    tile <= max(max_tile, quantum), padded_dim % tile == 0."""
    padded = _round_up(dim, quantum)
    if padded <= max_tile:
        return padded, padded
    t = (max_tile // quantum) * quantum
    while t >= quantum:
        if padded % t == 0:
            return t, padded
        t -= quantum
    t = (max_tile // quantum) * quantum
    return t, _round_up(padded, t)


def _pick_tile(dim, quantum, max_tile):
    """Tile for an axis that is allowed a partial (masked) edge block."""
    t = min(_round_up(dim, quantum), max_tile)
    return max((t // quantum) * quantum, quantum)


def _vmem_capacity_bytes():
    try:
        return int(pltpu.get_tpu_info().vmem_capacity_bytes)
    except Exception:
        return 64 * 1024 * 1024  # conservative fallback (v7x-sized)


def _patch_decoder_kernel(x_ref, w_ref, b_ref, o_ref, *, n_axis,
                          weight_resident):
    # x_ref: (tm, K)      compute dtype (bf16)
    # w_ref: (K, N_pad)   VMEM-resident (or (K, tn) when tiled fallback)
    # b_ref: (1, tn)      f32, pipelined per N tile
    # o_ref: (tm, tn)     out_dtype (bf16 by default)
    if weight_resident:
        tn = o_ref.shape[1]
        col = pl.multiple_of(pl.program_id(n_axis) * tn, 128)
        w = w_ref[:, pl.ds(col, tn)]
    else:
        w = w_ref[...]
    acc = jnp.dot(x_ref[...], w, preferred_element_type=jnp.float32)
    o_ref[...] = (acc + b_ref[...]).astype(o_ref.dtype)


@functools.partial(
    jax.jit,
    static_argnames=("img_size", "patch_size", "in_c", "out_dim",
                     "ncdhw_output", "compute_dtype", "out_dtype"),
)
def patch_decoder_forward(x, weight, bias, *, img_size, patch_size, in_c,
                          out_dim, ncdhw_output=True,
                          compute_dtype=jnp.bfloat16,
                          out_dtype=jnp.bfloat16):
    """Pallas implementation of PatchDecoder.forward.

    x      : any shape reshapeable to [B, in_c, g, g, g]
    weight : ConvTranspose3d weight, shape [in_c, out_dim, P, P, P]
    bias   : shape [out_dim]
    returns: [B, out_dim, img_size, img_size, img_size] (NCDHW) by default,
             or the permute-free patch-blocked layout
             [B, g, g, g, out_dim, P, P, P] when ncdhw_output=False.
    Note: x/weight are stored bf16 in HBM and the output is written in
    out_dtype (default bf16); accumulation is f32 on the MXU.
    """
    P = patch_size
    g = img_size // patch_size

    # --- glue: flatten the kernel==stride ConvTranspose3d to a GEMM --------
    x = x.reshape(-1, in_c, g, g, g)                       # [B, C, g, g, g]
    B = x.shape[0]
    x2d = jnp.transpose(x, (0, 2, 3, 4, 1)).reshape(B * g * g * g, in_c)
    N = out_dim * P * P * P
    w2d = weight.reshape(in_c, N)
    b2d = jnp.broadcast_to(bias.astype(jnp.float32)[:, None],
                           (out_dim, P * P * P)).reshape(1, N)

    M, K = x2d.shape
    x2d = x2d.astype(compute_dtype)
    w2d = w2d.astype(compute_dtype)

    in_bytes = jnp.dtype(compute_dtype).itemsize
    out_bytes = jnp.dtype(out_dtype).itemsize

    # --- per-generation tiling plan -----------------------------------------
    vmem_cap = _vmem_capacity_bytes()
    if vmem_cap >= 100 * 1024 * 1024:        # v5e / v6e: 128 MiB VMEM
        cap_list = [(512, 2048), (256, 1024), (128, 512), (64, 256), (16, 128)]
        clamp = 96 * 1024 * 1024
    else:                                    # v7x: 64 MiB per-TC VMEM
        cap_list = [(256, 1024), (128, 512), (64, 256), (16, 128)]
        clamp = 44 * 1024 * 1024
    budget = int(clamp * 0.85)

    tm = tn = N_pad = None
    weight_resident = False
    est = 0
    for max_tm, max_tn in cap_list:
        tm = _pick_tile(M, 16, max_tm)              # M edge block is masked
        tn, N_pad = _choose_tile(N, 128, max_tn)    # tn | N_pad, lane-dense
        w_res_bytes = 2 * K * N_pad * in_bytes      # conservative 2x
        weight_resident = w_res_bytes <= budget // 3
        w_bytes = w_res_bytes if weight_resident else 2 * K * tn * in_bytes
        est = (2 * tm * K * in_bytes + w_bytes + 2 * tn * 4
               + 2 * tm * tn * out_bytes)
        if est <= budget:
            break
    vmem_limit = int(min(max(2 * est, 16 * 1024 * 1024), clamp))

    if N_pad != N:
        w2d = jnp.pad(w2d, ((0, 0), (0, N_pad - N)))
        b2d = jnp.pad(b2d, ((0, 0), (0, N_pad - N)))

    grid_m = pl.cdiv(M, tm)      # no M padding: partial edge block is masked
    grid_n = N_pad // tn

    # Put the N-tile axis first when M collapses to one tile so megacore
    # (v7x: 2 TCs) still has a non-degenerate axis to shard.
    swap = (grid_m == 1 and grid_n > 1)
    if swap:
        grid = (grid_n, grid_m)
        n_axis = 0
        x_map = lambda j, i: (i, 0)
        w_map = (lambda j, i: (0, 0)) if weight_resident else (lambda j, i: (0, j))
        b_map = lambda j, i: (0, j)
        o_map = lambda j, i: (i, j)
    else:
        grid = (grid_m, grid_n)
        n_axis = 1
        x_map = lambda i, j: (i, 0)
        w_map = (lambda i, j: (0, 0)) if weight_resident else (lambda i, j: (0, j))
        b_map = lambda i, j: (0, j)
        o_map = lambda i, j: (i, j)

    w_block = (K, N_pad) if weight_resident else (K, tn)

    cost = pl.CostEstimate(
        flops=2 * M * K * N_pad,
        transcendentals=0,
        bytes_accessed=in_bytes * (M * K + K * N_pad)
        + out_bytes * M * N_pad + 4 * N_pad,
    )

    kernel = functools.partial(_patch_decoder_kernel, n_axis=n_axis,
                               weight_resident=weight_resident)

    out2d = pl.pallas_call(
        kernel,
        out_shape=jax.ShapeDtypeStruct((M, N_pad), out_dtype),
        grid_spec=pltpu.PrefetchScalarGridSpec(
            num_scalar_prefetch=0,
            grid=grid,
            in_specs=[
                pl.BlockSpec((tm, K), x_map),
                pl.BlockSpec(w_block, w_map),
                pl.BlockSpec((1, tn), b_map),
            ],
            out_specs=pl.BlockSpec((tm, tn), o_map),
        ),
        compiler_params=pltpu.CompilerParams(
            dimension_semantics=("parallel", "parallel"),
            vmem_limit_bytes=vmem_limit,
        ),
        cost_estimate=cost,
    )(x2d, w2d, b2d)

    # --- glue: scatter the non-overlapping P^3 patches back -----------------
    if N_pad != N:
        out2d = out2d[:, :N]
    # [M, N] -> [B, gd, gh, gw, out_dim, Pd, Ph, Pw]  (pure reshape)
    out = out2d.reshape(B, g, g, g, out_dim, P, P, P)
    if not ncdhw_output:
        return out
    # TODO(synk): the NCDHW permute is still a full extra read+write of the
    # output (now at out_dtype width, i.e. half the old f32 cost); a dedicated
    # lane-dense Pallas layout kernel would help further when img_size >= 128.
    out = jnp.transpose(out, (0, 4, 1, 5, 2, 6, 3, 7))
    return out.reshape(B, out_dim, img_size, img_size, img_size)


def _reference_forward(x, weight, bias, *, img_size, patch_size, in_c, out_dim):
    """Pure-JAX reference: ConvTranspose3d with kernel == stride."""
    P = patch_size
    g = img_size // patch_size
    x = x.reshape(-1, in_c, g, g, g)
    out = jnp.einsum("bcdhw,coijk->bodihjwk", x, weight,
                     precision=jax.lax.Precision.HIGHEST) + bias[
        None, :, None, None, None, None, None, None
    ]
    B = x.shape[0]
    return out.reshape(B, out_dim, img_size, img_size, img_size)


if __name__ == "__main__":
    # Small but faithful configuration.
    img_size, patch_size, in_c, out_dim = 16, 8, 32, 3
    g = img_size // patch_size  # patch_num = 2
    B = 2

    key = jax.random.PRNGKey(0)
    kx, kw, kb = jax.random.split(key, 3)

    # Input as fed to the PyTorch module (reshapeable to [B, C, g, g, g]).
    x = jax.random.normal(kx, (B, in_c, g, g, g), dtype=jnp.float32)
    # ConvTranspose3d params: weight [in_c, out_dim, P, P, P], bias [out_dim].
    weight = (
        jax.random.normal(
            kw, (in_c, out_dim, patch_size, patch_size, patch_size),
            dtype=jnp.float32) * 0.02
    )
    bias = jax.random.normal(kb, (out_dim,), dtype=jnp.float32) * 0.02

    out = patch_decoder_forward(
        x, weight, bias,
        img_size=img_size, patch_size=patch_size, in_c=in_c, out_dim=out_dim,
    )
    out = jax.block_until_ready(out)

    # Reference on the same bf16-rounded operands; the kernel additionally
    # rounds its output to bf16 (out_dtype), so tolerances are bf16-level.
    ref = _reference_forward(
        x.astype(jnp.bfloat16).astype(jnp.float32),
        weight.astype(jnp.bfloat16).astype(jnp.float32),
        bias.astype(jnp.float32),
        img_size=img_size, patch_size=patch_size, in_c=in_c, out_dim=out_dim,
    )

    assert out.shape == (B, out_dim, img_size, img_size, img_size), out.shape
    max_err = float(jnp.max(jnp.abs(out.astype(jnp.float32) - ref)))
    assert max_err < 1e-2, max_err
    print("KERNEL_OK")
</pallas_src>

<mosaic_0001>
module attributes {stable_mosaic.version = 11 : i64} {
  func.func @_patch_decoder_kernel(%arg0: i32, %arg1: i32, %arg2: memref<16x32xbf16, #tpu.memory_space<vmem>>, %arg3: memref<32x1536xbf16, #tpu.memory_space<vmem>>, %arg4: memref<1x768xf32, #tpu.memory_space<vmem>>, %arg5: memref<16x768xbf16, #tpu.memory_space<vmem>>) attributes {dimension_semantics = [#tpu.dimension_semantics<parallel>, #tpu.dimension_semantics<parallel>], iteration_bounds = array<i64: 2, 1>, scalar_prefetch = 0 : i64, scratch_operands = 0 : i64, tpu.core_type = #tpu.core_type<tc>, window_params = [{transform_indices = @transform_0, window_bounds = array<i64: 16, 32>}, {pipeline_mode = #tpu.pipeline_mode<synchronous>, transform_indices = @transform_1, window_bounds = array<i64: 32, 1536>}, {transform_indices = @transform_2, window_bounds = array<i64: 1, 768>}, {transform_indices = @transform_3, window_bounds = array<i64: 16, 768>}]} {
    %c768_i32 = arith.constant 768 : i32
    %0 = arith.muli %arg0, %c768_i32 : i32
    %1 = tpu.assume_multiple %0, 128 : i32
    %c0 = arith.constant 0 : index
    %2 = arith.index_cast %1 : i32 to index
    %3 = vector.load %arg3[%c0, %2] : memref<32x1536xbf16, #tpu.memory_space<vmem>>, vector<32x768xbf16>
    %c0_0 = arith.constant 0 : index
    %c0_1 = arith.constant 0 : index
    %4 = vector.load %arg2[%c0_0, %c0_1] : memref<16x32xbf16, #tpu.memory_space<vmem>>, vector<16x32xbf16>
    %cst = arith.constant dense<0.000000e+00> : vector<16x768xf32>
    %5 = tpu.matmul %4, %3, %cst {dimension_numbers = #tpu.dot_dimension_numbers<[1], [0], [0], [1], [0, 0, 1, 1], [], []>} : vector<16x32xbf16>, vector<32x768xbf16>, vector<16x768xf32> -> vector<16x768xf32>
    %c0_2 = arith.constant 0 : index
    %c0_3 = arith.constant 0 : index
    %6 = vector.load %arg4[%c0_2, %c0_3] : memref<1x768xf32, #tpu.memory_space<vmem>>, vector<1x768xf32>
    %7 = vector.broadcast %6 : vector<1x768xf32> to vector<16x768xf32>
    %8 = arith.addf %5, %7 : vector<16x768xf32>
    %9 = arith.truncf %8 : vector<16x768xf32> to vector<16x768xbf16>
    %c0_4 = arith.constant 0 : index
    %c0_5 = arith.constant 0 : index
    %10 = vector.load %arg5[%c0_4, %c0_5] : memref<16x768xbf16, #tpu.memory_space<vmem>>, vector<16x768xbf16>
    tpu.vector_store %arg5[%c0_4, %c0_5], %9 {strides = array<i32>} : memref<16x768xbf16, #tpu.memory_space<vmem>>, vector<16x768xbf16>,
    return
  }
  func.func @transform_0(%arg0: i32, %arg1: i32) -> (i32, i32) {
    %c0_i32 = arith.constant 0 : i32
    %c0_i32_0 = arith.constant 0 : i32
    return %arg1, %c0_i32 : i32, i32
  }
  func.func @transform_1(%arg0: i32, %arg1: i32) -> (i32, i32) {
    %c0_i32 = arith.constant 0 : i32
    %c0_i32_0 = arith.constant 0 : i32
    %c0_i32_1 = arith.constant 0 : i32
    return %c0_i32, %c0_i32_0 : i32, i32
  }
  func.func @transform_2(%arg0: i32, %arg1: i32) -> (i32, i32) {
    %c0_i32 = arith.constant 0 : i32
    %c0_i32_0 = arith.constant 0 : i32
    return %c0_i32, %arg0 : i32, i32
  }
  func.func @transform_3(%arg0: i32, %arg1: i32) -> (i32, i32) {
    %c0_i32 = arith.constant 0 : i32
    return %arg1, %arg0 : i32, i32
  }
}

</mosaic_0001>

<llo_original>
// kernel: patch_decoder_forward.1
$region0: #{patch_decoder_forward.1}
  #allocation0 [shape = 'u32[]', space=smem, size = 0x4, offset = 0x4, fixed_abs, tag = 'smem constant byte address 0x4 - core index']
  #allocation1 [shape = 'u32[144,128]{1,0:T(1,128)}', space=vmem, size = 0x12000, scoped, tag = 'internal scratch']
  %s0 = inlined_call_operand.vmem [shape: bf16[16,32], index: 0, kind: input, shape index: {}]
  %s1 = inlined_call_operand.vmem [shape: bf16[32,1536], index: 1, kind: input, shape index: {}]
  %s2 = inlined_call_operand.vmem [shape: f32[1,1536], index: 2, kind: input, shape index: {}]
  %s3 = inlined_call_operand.vmem [shape: bf16[16,1536], index: 3, kind: output, shape index: {}]
  %s4 = sld [smem:[#allocation0]]
  $region64: #{patch_decoder_forward.1} parent=0
    _
  %s6 = ssub.s32 1, %s4
  %s7 = scalar_select 0, %s6, %s4
  $region1: #{patch_decoder_forward.1} parent=0
    #allocation2 [shape = 'u8[49152]{0}', space=vmem, size = 0xc000, scoped, tag = 'output window, operand 0']
    loop: start=0, step=1, limit=4
    $region2: #{patch_decoder_forward.1} parent=1 // loop_pre_header
      _
    $region3: #{patch_decoder_forward.1} parent=1 // loop_header
      %s9 = sphi 0, %s13
      %p10 = scmp.ge.s32.totalorder %s9, 4
      %s16 = sphi 0, %s28
      %s17 = sphi 0, %s24
      %s18 = sphi 0, %s16
      %s19 = sphi 0, %s17
      %s20 = sphi 0, %s18
      %s21 = sphi 0, %s19
      %s31 = sphi 0, %s33
      %s34 = sphi 0, %s31
      %s35 = sphi 0, %s34
      %s51 = sphi 0, %s35
      %s55 = sphi 0, %s55
      %s57 = sphi 0, %s55
      %s58 = sphi 0, %s57
      %s72 = sphi 0, %s58
      %s78 = sphi 0, %s80
      %s81 = sphi 0, %s78
      %s82 = sphi 0, %s81
      %s98 = sphi 0, %s82
      %s106 = sphi 0, %s108
      %s109 = sphi 0, %s106
      %s110 = sphi 0, %s109
      %s126 = sphi 0, %s110
    $region4: #{patch_decoder_forward.1} parent=1 // loop_header_branch
      %12 = sbr.rel (%p10) target = $region8
    $region5: #{patch_decoder_forward.1} parent=1 // loop_body
      %s14 = ssub.s32 %s9, 1
      %s15 = ssub.s32 %s9, 2
      %s22 = sadd.s32 1, %s17
      %p23 = scmp.ge.s32.totalorder %s22, 1
      %s24 = scalar_select %p23, 0, %s22
      %s25 = sadd.s32 1, %s16
      %s26 = scalar_select %p23, %s25, %s16
      %p27 = scmp.ge.s32.totalorder %s26, 2
      %s28 = scalar_select %p27, 0, %s26
      %s29 = ssub.s32 %s17, %s24
      %p30 = scmp.eq.s32.totalorder %s29, 0
      %s32 = sadd.s32 %s31, 1
      %s33 = scalar_select %p30, %s31, %s32
      %p36 = pneg %p30
      %p37 = scmp.eq.s32.totalorder %s9, 1
      %p38 = por %p36, %p37
      %p39 = scmp.ne.s32.totalorder %s31, %s34
      %p40 = scmp.eq.s32.totalorder %s9, 0
      %p41 = por %p39, %p40
      %p42 = scmp.ne.s32.totalorder %s31, %s34
      %p43 = scmp.eq.s32.totalorder %s14, 1
      %p44 = por %p42, %p43
      %p45 = scmp.ne.s32.totalorder %s34, %s35
      %p46 = scmp.eq.s32.totalorder %s14, 0
      %p47 = por %p45, %p46
      %p48 = scmp.ne.s32.totalorder %s34, %s35
      %p49 = scmp.eq.s32.totalorder %s15, 1
      %p50 = por %p48, %p49
      %p52 = scmp.ne.s32.totalorder %s35, %s51
      %p53 = scmp.eq.s32.totalorder %s15, 0
      %p54 = por %p52, %p53
      %s56 = sadd.s32 %s55, 1
      %p59 = scmp.eq.s32.totalorder %s9, 1
      %p60 = scmp.ne.s32.totalorder %s55, %s57
      %p61 = scmp.eq.s32.totalorder %s9, 0
      %p62 = por %p60, %p61
      %p63 = scmp.ne.s32.totalorder %s55, %s57
      %p64 = scmp.eq.s32.totalorder %s14, 1
      %p65 = por %p63, %p64
      %p66 = scmp.ne.s32.totalorder %s57, %s58
      %p67 = scmp.eq.s32.totalorder %s14, 0
      %p68 = por %p66, %p67
      %p69 = scmp.ne.s32.totalorder %s57, %s58
      %p70 = scmp.eq.s32.totalorder %s15, 1
      %p71 = por %p69, %p70
      %p73 = scmp.ne.s32.totalorder %s58, %s72
      %p74 = scmp.eq.s32.totalorder %s15, 0
      %p75 = por %p73, %p74
      %s76 = ssub.s32 %s16, %s28
      %p77 = scmp.eq.s32.totalorder %s76, 0
      %s79 = sadd.s32 %s78, 1
      %s80 = scalar_select %p77, %s78, %s79
      %p83 = pneg %p77
      %p84 = scmp.eq.s32.totalorder %s9, 1
      %p85 = por %p83, %p84
      %p86 = scmp.ne.s32.totalorder %s78, %s81
      %p87 = scmp.eq.s32.totalorder %s9, 0
      %p88 = por %p86, %p87
      %p89 = scmp.ne.s32.totalorder %s78, %s81
      %p90 = scmp.eq.s32.totalorder %s14, 1
      %p91 = por %p89, %p90
      %p92 = scmp.ne.s32.totalorder %s81, %s82
      %p93 = scmp.eq.s32.totalorder %s14, 0
      %p94 = por %p92, %p93
      %p95 = scmp.ne.s32.totalorder %s81, %s82
      %p96 = scmp.eq.s32.totalorder %s15, 1
      %p97 = por %p95, %p96
      %p99 = scmp.ne.s32.totalorder %s82, %s98
      %p100 = scmp.eq.s32.totalorder %s15, 0
      %p101 = por %p99, %p100
      %s102 = ssub.s32 %s17, %s24
      %s103 = ssub.s32 %s16, %s28
      %s104 = sor.u32 %s102, %s103
      %p105 = scmp.eq.s32.totalorder %s104, 0
      %s107 = sadd.s32 %s106, 1
      %s108 = scalar_select %p105, %s106, %s107
      %p111 = pneg %p105
      %p112 = scmp.eq.s32.totalorder %s9, 1
      %p113 = por %p111, %p112
      %p114 = scmp.ne.s32.totalorder %s106, %s109
      %p115 = scmp.eq.s32.totalorder %s9, 0
      %p116 = por %p114, %p115
      %p117 = scmp.ne.s32.totalorder %s106, %s109
      %p118 = scmp.eq.s32.totalorder %s14, 1
      %p119 = por %p117, %p118
      %p120 = scmp.ne.s32.totalorder %s109, %s110
      %p121 = scmp.eq.s32.totalorder %s14, 0
      %p122 = por %p120, %p121
      %p123 = scmp.ne.s32.totalorder %s109, %s110
      %p124 = scmp.eq.s32.totalorder %s15, 1
      %p125 = por %p123, %p124
      %p127 = scmp.ne.s32.totalorder %s110, %s126
      %p128 = scmp.eq.s32.totalorder %s15, 0
      %p129 = por %p127, %p128
      %p130 = scmp.le.s32.totalorder 1, %s9
      %p131 = scmp.lt.s32.totalorder %s9, 3
      %p132 = pnand %p130, %p131
      %p133 = pneg %p132
      // Predicated region
      $region9: #{patch_decoder_forward.1} parent=5 // pred_check
        _
      $region10: #{patch_decoder_forward.1} parent=5 // pred_check_branch
        %135 = sbr.rel (%p132) target = $region12
      $region11: #{patch_decoder_forward.1} parent=5 // pred_region
        %s136 = ssub.s32 %s9, 1
        // Predicated region
        $region13: #{patch_decoder_forward.1} parent=11 // pred_check
          %p137 = pneg %p47
        $region14: #{patch_decoder_forward.1} parent=11 // pred_check_branch
          %139 = sbr.rel (%p137) target = $region16
        $region15: #{patch_decoder_forward.1} parent=11 // pred_region
          %s140 = smul.u32 2, %s19
          %p141 = scmp.lt.s32.totalorder %s140, 1
          %s142 = scalar_select %p141, %s140, 1
          %s143 = smul.addr %s142, 4
          %s144 = scalar_lea.vmem %s0, %s143
          %s145 = smul.u32 2, %s19
        $region16: #{patch_decoder_forward.1} parent=11 // pred_fallthru
          _
        // Predicated region
        $region17: #{patch_decoder_forward.1} parent=11 // pred_check
          %p146 = pneg %p68
        $region18: #{patch_decoder_forward.1} parent=11 // pred_check_branch
          %148 = sbr.rel (%p146) target = $region20
        $region19: #{patch_decoder_forward.1} parent=11 // pred_region
          _
        $region20: #{patch_decoder_forward.1} parent=11 // pred_fallthru
          _
      $region12: #{patch_decoder_forward.1} parent=5 // pred_fallthru
        _
      %p149 = scmp.lt.s32.totalorder %s9, 2
      // Predicated region
      $region21: #{patch_decoder_forward.1} parent=5 // pred_check
        %p150 = pneg %p149
      $region22: #{patch_decoder_forward.1} parent=5 // pred_check_branch
        %152 = sbr.rel (%p150) target = $region24
      $region23: #{patch_decoder_forward.1} parent=5 // pred_region
        // Predicated region
        $region25: #{patch_decoder_forward.1} parent=23 // pred_check
          %p153 = pneg %p88
        $region26: #{patch_decoder_forward.1} parent=23 // pred_check_branch
          %155 = sbr.rel (%p153) target = $region28
        $region27: #{patch_decoder_forward.1} parent=23 // pred_region
          %s156 = smul.u32 6, %s16
          %p157 = scmp.lt.s32.totalorder %s156, 11
          %s158 = scalar_select %p157, %s156, 11
          %s159 = scalar_lea.vmem %s2, %s158
          %s160 = smul.u32 6, %s16
        $region28: #{patch_decoder_forward.1} parent=23 // pred_fallthru
          _
      $region24: #{patch_decoder_forward.1} parent=5 // pred_fallthru
        _
      %p161 = scmp.le.s32.totalorder 1, %s9
      %p162 = scmp.lt.s32.totalorder %s9, 3
      %p163 = pnand %p161, %p162
      %p164 = pneg %p163
      // Predicated region
      $region29: #{patch_decoder_forward.1} parent=5 // pred_check
        _
      $region30: #{patch_decoder_forward.1} parent=5 // pred_check_branch
        %166 = sbr.rel (%p163) target = $region32
      $region31: #{patch_decoder_forward.1} parent=5 // pred_region
        %s167 = ssub.s32 %s9, 1
        %s168 = smul.u32 2, %s19
        %p169 = scmp.lt.s32.totalorder %s168, 1
        %s170 = scalar_select %p169, %s168, 1
        %s171 = smul.addr %s170, 4
        %s172 = scalar_lea.vmem %s0, %s171
        %p173 = pneg %p47
        %p174 = pneg %p44
        %p175 = pneg %p68
        %p176 = pneg %p65
        %s177 = smul.u32 6, %s18
        %p178 = scmp.lt.s32.totalorder %s177, 11
        %s179 = scalar_select %p178, %s177, 11
        %s180 = scalar_lea.vmem %s2, %s179
        %p181 = pneg %p94
        %p182 = pneg %p91
        %p183 = pneg %p122
        %p184 = pneg %p119
        %s185 = sand.u32 %s109, 1
        %s186 = sand.u32 %s109, 1
        %s187 = smul.addr %s186, 48
        %s188 = scalar_lea.vmem [#allocation2], %s187
        %s189 = smul.u32 2, %s19
        %p190 = scmp.lt.s32.totalorder %s189, 1
        %s191 = scalar_select %p190, %s189, 1
        %s192 = smul.addr %s191, 4
        %s193 = scalar_lea.vmem %s0, %s192
        %s194 = smul.u32 2, %s19
        %s195 = smul.u32 6, %s18
        %p196 = scmp.lt.s32.totalorder %s195, 11
        %s197 = scalar_select %p196, %s195, 11
        %s198 = scalar_lea.vmem %s2, %s197
        %s199 = smul.u32 6, %s18
        %s200 = smul.u32 2, %s19
        %s201 = smul.u32 6, %s18
        %s203 = smul.u32 %s18, 768
        %s204 = sshra.s32 %s203, 7
        %s205 = sand.u32 %s203, 127
        %s206 = smul.addr %s204, 4
        %s207 = scalar_lea.vmem %s1, %s206
        %v208 = vld [vmem:[%s207] sm:$0xff]
        %v209 = vld [vmem:[%s207 + $0x8] sm:$0xff]
        %v210 = vld [vmem:[%s207 + $0x10] sm:$0xff]
        %v211 = vld [vmem:[%s207 + $0x30] sm:$0xff]
        %v212 = vld [vmem:[%s207 + $0x38] sm:$0xff]
        %v213 = vld [vmem:[%s207 + $0x40] sm:$0xff]
        %v214 = vld [vmem:[%s207 + $0x60] sm:$0xff]
        %v215 = vld [vmem:[%s207 + $0x68] sm:$0xff]
        %v216 = vld [vmem:[%s207 + $0x70] sm:$0xff]
        %v217 = vld [vmem:[%s207 + $0x90] sm:$0xff]
        %v218 = vld [vmem:[%s207 + $0x98] sm:$0xff]
        %v219 = vld [vmem:[%s207 + $0xa0] sm:$0xff]
        %v220 = vld [vmem:[%s193] sm:$0xf]
        %v221 = vld [vmem:[%s193 + $0x4] sm:$0xf]
        %v222 = vld [vmem:[%s198] sm:$0x3f]
        %v224 = vlaneseq
        %v225 = vshrl.u32 %v224, 7
        %v226 = vsub.s32 0, %v225
        %v227 = vrot.slane %v222, %v226
        %v228 = vlaneseq
        %v229 = vshrl.u32 %v228, 7
        %v230 = vsub.s32 1, %v229
        %v231 = vrot.slane %v222, %v230
        %v232 = vlaneseq
        %v233 = vshrl.u32 %v232, 7
        %v234 = vsub.s32 2, %v233
        %v235 = vrot.slane %v222, %v234
        %v236 = vlaneseq
        %v237 = vshrl.u32 %v236, 7
        %v238 = vsub.s32 3, %v237
        %v239 = vrot.slane %v222, %v238
        %v240 = vlaneseq
        %v241 = vshrl.u32 %v240, 7
        %v242 = vsub.s32 4, %v241
        %v243 = vrot.slane %v222, %v242
        %v244 = vlaneseq
        %v245 = vshrl.u32 %v244, 7
        %v246 = vsub.s32 5, %v245
        %v247 = vrot.slane %v222, %v246
        %v256 = vunpack.c.l.b16 %v220
        %v257 = vunpack.c.l.b16 %v221
        %v258 = vpack.c.b16 %v257, %v256
        %v271 = vunpack.c.l.b16 %v208
        %v272 = vunpack.c.h.b16 %v208
        %v273 = vunpack.c.l.b16 %v209
        %v274 = vunpack.c.h.b16 %v209
        %v275 = vunpack.c.l.b16 %v210
        %v276 = vunpack.c.h.b16 %v210
        %v277 = vunpack.c.l.b16 %v211
        %v278 = vunpack.c.h.b16 %v211
        %v279 = vunpack.c.l.b16 %v212
        %v280 = vunpack.c.h.b16 %v212
        %v281 = vunpack.c.l.b16 %v213
        %v282 = vunpack.c.h.b16 %v213
        %v283 = vunpack.c.l.b16 %v214
        %v284 = vunpack.c.h.b16 %v214
        %v285 = vunpack.c.l.b16 %v215
        %v286 = vunpack.c.h.b16 %v215
        %v287 = vunpack.c.l.b16 %v216
        %v288 = vunpack.c.h.b16 %v216
        %v289 = vunpack.c.l.b16 %v217
        %v290 = vunpack.c.h.b16 %v217
        %v291 = vunpack.c.l.b16 %v218
        %v292 = vunpack.c.h.b16 %v218
        %v293 = vunpack.c.l.b16 %v219
        %v294 = vunpack.c.h.b16 %v219
        %v295 = vpack.c.b16 %v277, %v271
        %v296 = vpack.c.b16 %v278, %v272
        %v297 = vpack.c.b16 %v279, %v273
        %v298 = vpack.c.b16 %v280, %v274
        %v299 = vpack.c.b16 %v281, %v275
        %v300 = vpack.c.b16 %v282, %v276
        %v301 = vpack.c.b16 %v289, %v283
        %v302 = vpack.c.b16 %v290, %v284
        %v303 = vpack.c.b16 %v291, %v285
        %v304 = vpack.c.b16 %v292, %v286
        %v305 = vpack.c.b16 %v293, %v287
        %v306 = vpack.c.b16 %v294, %v288
        %vm319 = vcmask 261120
        %v321 = vsel %vm319, %v258, 0
        %323 = vmatprep.subr.bf16.mxu0 %v296
        %324 = vmatpush1.bf16.msra.mxu0 %v295
        %325 = vmatprep.subr.bf16.mxu0 %v302
        %326 = vmatpush1.bf16.msra.mxu0 %v301
        %327 = vmatprep.subr.bf16.mxu0 0
        %328 = vmatpush1.bf16.msra.mxu0 0
        %329 = vmatprep.subr.bf16.mxu0 0
        %330 = vmatpush1.bf16.msra.mxu0 0
        %331 = vmatprep.subr.bf16.mxu0 0
        %332 = vmatpush1.bf16.msra.mxu0 0
        %333 = vmatprep.subr.bf16.mxu0 0
        %334 = vmatpush1.bf16.msra.mxu0 0
        %335 = vmatprep.subr.bf16.mxu0 0
        %336 = vmatpush1.bf16.msra.mxu0 0
        %337 = vmatprep.subr.bf16.mxu0 0
        %338 = vmatpush1.bf16.msra.mxu0 0
        %339 = vmatprep.subr.bf16.mxu0 0
        %340 = vmatpush1.bf16.msra.mxu0 0
        %341 = vmatprep.subr.bf16.mxu0 0
        %342 = vmatpush1.bf16.msra.mxu0 0
        %343 = vmatprep.subr.bf16.mxu0 0
        %344 = vmatpush1.bf16.msra.mxu0 0
        %345 = vmatprep.subr.bf16.mxu0 0
        %346 = vmatpush1.bf16.msra.mxu0 0
        %347 = vmatprep.subr.bf16.mxu0 0
        %348 = vmatpush1.bf16.msra.mxu0 0
        %349 = vmatprep.subr.bf16.mxu0 0
        %350 = vmatpush1.bf16.msra.mxu0 0
        %351 = vmatprep.subr.bf16.mxu0 0
        %352 = vmatpush1.bf16.msra.mxu0 0
        %353 = vmatprep.subr.bf16.mxu0 0
        %354 = vmatpush1.bf16.msra.mxu0 0
        %355 = vmatprep.mubr.bf16.mxu0 0
        %356 = vmatmul.mubr.bf16.gmra.mrb[0].mxu0 %v321
        %v357 = vpop.f32.mrb[0].mxu0
        %v358 = vadd.f32 %v227, %v357
        %v359 = vpop.f32.mrb[0].mxu0
        %v360 = vadd.f32 %v231, %v359
        %v361 = vpop.f32.mrb[0].mxu0
        %v362 = vadd.f32 %v227, %v361
        %v363 = vpop.f32.mrb[0].mxu0
        %v364 = vadd.f32 %v231, %v363
        %365 = vdwg.mxu0
        %366 = vmatprep.subr.bf16.mxu0 %v298
        %367 = vmatpush1.bf16.msra.mxu0 %v297
        %368 = vmatprep.subr.bf16.mxu0 %v304
        %369 = vmatpush1.bf16.msra.mxu0 %v303
        %370 = vmatprep.subr.bf16.mxu0 0
        %371 = vmatpush1.bf16.msra.mxu0 0
        %372 = vmatprep.subr.bf16.mxu0 0
        %373 = vmatpush1.bf16.msra.mxu0 0
        %374 = vmatprep.subr.bf16.mxu0 0
        %375 = vmatpush1.bf16.msra.mxu0 0
        %376 = vmatprep.subr.bf16.mxu0 0
        %377 = vmatpush1.bf16.msra.mxu0 0
        %378 = vmatprep.subr.bf16.mxu0 0
        %379 = vmatpush1.bf16.msra.mxu0 0
        %380 = vmatprep.subr.bf16.mxu0 0
        %381 = vmatpush1.bf16.msra.mxu0 0
        %382 = vmatprep.subr.bf16.mxu0 0
        %383 = vmatpush1.bf16.msra.mxu0 0
        %384 = vmatprep.subr.bf16.mxu0 0
        %385 = vmatpush1.bf16.msra.mxu0 0
        %386 = vmatprep.subr.bf16.mxu0 0
        %387 = vmatpush1.bf16.msra.mxu0 0
        %388 = vmatprep.subr.bf16.mxu0 0
        %389 = vmatpush1.bf16.msra.mxu0 0
        %390 = vmatprep.subr.bf16.mxu0 0
        %391 = vmatpush1.bf16.msra.mxu0 0
        %392 = vmatprep.subr.bf16.mxu0 0
        %393 = vmatpush1.bf16.msra.mxu0 0
        %394 = vmatprep.subr.bf16.mxu0 0
        %395 = vmatpush1.bf16.msra.mxu0 0
        %396 = vmatprep.subr.bf16.mxu0 0
        %397 = vmatpush1.bf16.msra.mxu0 0
        %398 = vmatprep.mubr.bf16.mxu0 0
        %399 = vmatmul.mubr.bf16.gmra.mrb[0].mxu0 %v321
        %v400 = vpop.f32.mrb[0].mxu0
        %v401 = vadd.f32 %v235, %v400
        %v402 = vpop.f32.mrb[0].mxu0
        %v403 = vadd.f32 %v239, %v402
        %v404 = vpop.f32.mrb[0].mxu0
        %v405 = vadd.f32 %v235, %v404
        %v406 = vpop.f32.mrb[0].mxu0
        %v407 = vadd.f32 %v239, %v406
        %408 = vdwg.mxu0
        %409 = vmatprep.subr.bf16.mxu0 %v300
        %410 = vmatpush1.bf16.msra.mxu0 %v299
        %411 = vmatprep.subr.bf16.mxu0 %v306
        %412 = vmatpush1.bf16.msra.mxu0 %v305
        %413 = vmatprep.subr.bf16.mxu0 0
        %414 = vmatpush1.bf16.msra.mxu0 0
        %415 = vmatprep.subr.bf16.mxu0 0
        %416 = vmatpush1.bf16.msra.mxu0 0
        %417 = vmatprep.subr.bf16.mxu0 0
        %418 = vmatpush1.bf16.msra.mxu0 0
        %419 = vmatprep.subr.bf16.mxu0 0
        %420 = vmatpush1.bf16.msra.mxu0 0
        %421 = vmatprep.subr.bf16.mxu0 0
        %422 = vmatpush1.bf16.msra.mxu0 0
        %423 = vmatprep.subr.bf16.mxu0 0
        %424 = vmatpush1.bf16.msra.mxu0 0
        %425 = vmatprep.subr.bf16.mxu0 0
        %426 = vmatpush1.bf16.msra.mxu0 0
        %427 = vmatprep.subr.bf16.mxu0 0
        %428 = vmatpush1.bf16.msra.mxu0 0
        %429 = vmatprep.subr.bf16.mxu0 0
        %430 = vmatpush1.bf16.msra.mxu0 0
        %431 = vmatprep.subr.bf16.mxu0 0
        %432 = vmatpush1.bf16.msra.mxu0 0
        %433 = vmatprep.subr.bf16.mxu0 0
        %434 = vmatpush1.bf16.msra.mxu0 0
        %435 = vmatprep.subr.bf16.mxu0 0
        %436 = vmatpush1.bf16.msra.mxu0 0
        %437 = vmatprep.subr.bf16.mxu0 0
        %438 = vmatpush1.bf16.msra.mxu0 0
        %439 = vmatprep.subr.bf16.mxu0 0
        %440 = vmatpush1.bf16.msra.mxu0 0
        %441 = vmatprep.mubr.bf16.mxu0 0
        %442 = vmatmul.mubr.bf16.gmra.mrb[0].mxu0 %v321
        %v443 = vpop.f32.mrb[0].mxu0
        %v444 = vadd.f32 %v243, %v443
        %v445 = vpop.f32.mrb[0].mxu0
        %v446 = vadd.f32 %v247, %v445
        %v447 = vpop.f32.mrb[0].mxu0
        %v448 = vadd.f32 %v243, %v447
        %v449 = vpop.f32.mrb[0].mxu0
        %v450 = vadd.f32 %v247, %v449
        %451 = vdwg.mxu0
        %v452 = vpack.c.bf16 %v362, %v358
        %v453 = vpack.c.bf16 %v364, %v360
        %v454 = vpack.c.bf16 %v405, %v401
        %v455 = vpack.c.bf16 %v407, %v403
        %v456 = vpack.c.bf16 %v448, %v444
        %v457 = vpack.c.bf16 %v450, %v446
        %v464 = vunpack.c.l.b16 %v452
        %v465 = vunpack.c.l.b16 %v453
        %v466 = vunpack.c.l.b16 %v454
        %v467 = vunpack.c.l.b16 %v455
        %v468 = vunpack.c.l.b16 %v456
        %v469 = vunpack.c.l.b16 %v457
        %v470 = vunpack.c.h.b16 %v452
        %v471 = vunpack.c.h.b16 %v453
        %v472 = vunpack.c.h.b16 %v454
        %v473 = vunpack.c.h.b16 %v455
        %v474 = vunpack.c.h.b16 %v456
        %v475 = vunpack.c.h.b16 %v457
        %v476 = vpack.c.b16 %v465, %v464
        %v477 = vpack.c.b16 %v467, %v466
        %v478 = vpack.c.b16 %v469, %v468
        %v479 = vpack.c.b16 %v471, %v470
        %v480 = vpack.c.b16 %v473, %v472
        %v481 = vpack.c.b16 %v475, %v474
        %488 = vst [vmem:[%s188] sm:$0xff] %v476
        %489 = vst [vmem:[%s188 + $0x8] sm:$0xff] %v477
        %490 = vst [vmem:[%s188 + $0x10] sm:$0xff] %v478
        %491 = vst [vmem:[%s188 + $0x18] sm:$0xff] %v479
        %492 = vst [vmem:[%s188 + $0x20] sm:$0xff] %v480
        %493 = vst [vmem:[%s188 + $0x28] sm:$0xff] %v481
        %s494 = sand.u32 %s109, 1
        %s495 = sand.u32 %s109, 1
        %s496 = smul.addr %s495, 48
        %s497 = scalar_lea.vmem [#allocation2], %s496
        // Predicated region
        $region33: #{patch_decoder_forward.1} parent=31 // pred_check
          %p498 = pneg %p119
        $region34: #{patch_decoder_forward.1} parent=31 // pred_check_branch
          %500 = sbr.rel (%p498) target = $region36
        $region35: #{patch_decoder_forward.1} parent=31 // pred_region
          %s501 = smul.u32 2, %s19
          %s502 = smul.u32 6, %s18
          %s503 = smul.addr %s501, 12
          %s504 = sadd.s32 %s502, %s503
          %s505 = smul.addr %s504, 4
          %s506 = scalar_lea.vmem %s3, %s505
          // Predicated region
          $region37: #{patch_decoder_forward.1} parent=35 // pred_check
            _
          $region38: #{patch_decoder_forward.1} parent=35 // pred_check_branch
            %508 = sbr.rel (0) target = $region40
          $region39: #{patch_decoder_forward.1} parent=35 // pred_region
            // Predicated region
            $region41: #{patch_decoder_forward.1} parent=39 // pred_check
              _
            $region42: #{patch_decoder_forward.1} parent=39 // pred_check_branch
              %510 = sbr.rel (0) target = $region44
            $region43: #{patch_decoder_forward.1} parent=39 // pred_region
              loop: start=0, step=1, limit=1
              $region45: #{patch_decoder_forward.1} parent=43 // loop_pre_header
                _
              $region46: #{patch_decoder_forward.1} parent=43 // loop_header
                %s512 = sphi 0, %s516
                %p513 = scmp.ge.s32.totalorder %s512, 1
                %s517 = sphi %s497, %s497
                %s518 = sphi %s506, %s506
              $region47: #{patch_decoder_forward.1} parent=43 // loop_header_branch
                %515 = sbr.rel (%p513) target = $region51
              $region48: #{patch_decoder_forward.1} parent=43 // loop_body
                %v519 = vld [vmem:[%s517] sm:$0xff]
                %520 = vst [vmem:[%s518] sm:$0xff] %v519
                %v521 = vld [vmem:[%s517 + $0x8] sm:$0xff]
                %522 = vst [vmem:[%s518 + $0x8] sm:$0xff] %v521
                %v523 = vld [vmem:[%s517 + $0x10] sm:$0xff]
                %524 = vst [vmem:[%s518 + $0x10] sm:$0xff] %v523
                %v525 = vld [vmem:[%s517 + $0x18] sm:$0xff]
                %526 = vst [vmem:[%s518 + $0x30] sm:$0xff] %v525
                %v527 = vld [vmem:[%s517 + $0x20] sm:$0xff]
                %528 = vst [vmem:[%s518 + $0x38] sm:$0xff] %v527
                %v529 = vld [vmem:[%s517 + $0x28] sm:$0xff]
                %530 = vst [vmem:[%s518 + $0x40] sm:$0xff] %v529
              $region49: #{patch_decoder_forward.1} parent=43 // loop_footer
                %s516 = sadd.s32 1, %s512
              $region50: #{patch_decoder_forward.1} parent=43 // loop_footer_branch
                %511 = sbr.rel target = $region46
              $region51: #{patch_decoder_forward.1} parent=43 // loop_exit
                _
            $region44: #{patch_decoder_forward.1} parent=39 // pred_fallthru
              _
            // Predicated region
            $region52: #{patch_decoder_forward.1} parent=39 // pred_check
              _
            $region53: #{patch_decoder_forward.1} parent=39 // pred_check_branch
              %532 = sbr.rel target = $region55
            $region54: #{patch_decoder_forward.1} parent=39 // pred_region
              _
            $region55: #{patch_decoder_forward.1} parent=39 // pred_fallthru
              _
          $region40: #{patch_decoder_forward.1} parent=35 // pred_fallthru
            _
          %533 = vnop
        $region36: #{patch_decoder_forward.1} parent=31 // pred_fallthru
          _
      $region32: #{patch_decoder_forward.1} parent=5 // pred_fallthru
        _
      %p534 = scmp.le.s32.totalorder 2, %s9
      // Predicated region
      $region56: #{patch_decoder_forward.1} parent=5 // pred_check
        %p535 = pneg %p534
      $region57: #{patch_decoder_forward.1} parent=5 // pred_check_branch
        %537 = sbr.rel (%p535) target = $region59
      $region58: #{patch_decoder_forward.1} parent=5 // pred_region
        %s538 = ssub.s32 %s9, 2
        // Predicated region
        $region60: #{patch_decoder_forward.1} parent=58 // pred_check
          %p539 = pneg %p125
        $region61: #{patch_decoder_forward.1} parent=58 // pred_check_branch
          %541 = sbr.rel (%p539) target = $region63
        $region62: #{patch_decoder_forward.1} parent=58 // pred_region
          %s542 = sand.u32 %s110, 1
          %s543 = sand.u32 %s110, 1
          %s544 = smul.addr %s543, 48
          %s545 = scalar_lea.vmem [#allocation2], %s544
        $region63: #{patch_decoder_forward.1} parent=58 // pred_fallthru
          _
      $region59: #{patch_decoder_forward.1} parent=5 // pred_fallthru
        _
    $region6: #{patch_decoder_forward.1} parent=1 // loop_footer
      %s13 = sadd.s32 1, %s9
    $region7: #{patch_decoder_forward.1} parent=1 // loop_footer_branch
      %8 = sbr.rel target = $region3
    $region8: #{patch_decoder_forward.1} parent=1 // loop_exit
      _

</llo_original>
